<compile_context>
chip_gen: v7x
topology: tpu7x:2x2x1
jax: 0.10.0
libtpu: 0.0.40
codegen_flags: <defaults>
</compile_context>

<pallas_src>
import functools

import jax
import jax.numpy as jnp
from jax.experimental import pallas as pl
from jax.experimental.pallas import tpu as pltpu


def _silu(x):
    # x * sigmoid(x); the reciprocal runs on the (otherwise idle) EUP slot.
    return x * pl.reciprocal(1.0 + jnp.exp(-x), approx=True)


# ----------------------------------------------------------------------------
# Pallas kernels
# ----------------------------------------------------------------------------
def _conv3x3_kernel(*refs, Ho, Wo, Cin, stride, apply_silu, add_temb):
    """3x3 conv (padding=1) on one sample as a single K=9*Cin MXU GEMM.

    refs (in order):
      x_ref: (1, H+2, W+2, Cin)  zero-padded input tile (VMEM resident)
      w_ref: (9*Cin, Cout)       bf16 weights, tap-major (dh*3+dw) then cin
      b_ref: (1, Cout)           f32 bias
      t_ref: (1, 1, Cout)        per-output-sample temb row (only if add_temb)
      o_ref: (1, Ho*Wo, Cout)    output tile
    """
    if add_temb:
        x_ref, w_ref, b_ref, t_ref, o_ref = refs
    else:
        x_ref, w_ref, b_ref, o_ref = refs

    wins = []
    for dh in range(3):
        for dw in range(3):
            if stride == 1:
                win = x_ref[0, dh:dh + Ho, dw:dw + Wo, :]            # (Ho, Wo, Cin)
            else:  # stride == 2: load a dense slab, keep the even phase only.
                win = x_ref[0, dh:dh + 2 * Ho, dw:dw + 2 * Wo, :]    # (2Ho, 2Wo, Cin)
                win = win.reshape(Ho, 2, 2 * Wo, Cin)[:, 0]          # even rows
                win = win.reshape(Ho, Wo, 2, Cin)[:, :, 0, :]        # even cols
            wins.append(win)

    # Fold the 9 taps into the contraction dimension: (Ho*Wo, 9*Cin) @ (9*Cin, Cout)
    p = jnp.concatenate(wins, axis=-1)                               # (Ho, Wo, 9*Cin)
    p = p.reshape(Ho * Wo, 9 * Cin).astype(jnp.bfloat16)

    acc = jnp.dot(p, w_ref[...], preferred_element_type=jnp.float32)
    acc = acc + b_ref[...]
    if apply_silu:
        acc = _silu(acc)
    if add_temb:
        acc = acc + t_ref[0]                                         # (1, Cout) broadcast
    o_ref[0] = acc.astype(o_ref.dtype)


def _silu_linear_kernel(t_ref, w_ref, b_ref, o_ref):
    # y = silu(t) @ W + b   (time_emb_proj)
    t = _silu(t_ref[...].astype(jnp.float32))
    y = jnp.dot(t, w_ref[...], preferred_element_type=jnp.float32) + b_ref[...]
    o_ref[...] = y.astype(o_ref.dtype)


def _temb_residual_kernel(e_ref, w1_ref, b1_ref, w2_ref, b2_ref, o_ref, *, n, hw):
    # 1x1 conv -> SiLU -> 1x1 conv -> sum over spatial, with the spatial sum
    # hoisted before the second GEMM:
    #   sum_s(W2 @ silu(W1 @ x_s + b1) + b2) == (sum_s silu(W1 @ x_s + b1)) @ W2 + hw*b2
    x = e_ref[...].astype(jnp.float32)                                # (n*hw, C)
    y = jnp.dot(x, w1_ref[...], preferred_element_type=jnp.float32) + b1_ref[...]
    y = _silu(y)
    y = jnp.sum(y.reshape(n, hw, y.shape[-1]), axis=1)                # (n, T)
    r = jnp.dot(y, w2_ref[...], preferred_element_type=jnp.float32) + hw * b2_ref[...]
    o_ref[...] = r.astype(o_ref.dtype)


# ----------------------------------------------------------------------------
# Wrappers
# ----------------------------------------------------------------------------
def conv2d_3x3(x_nhwc, w_hwio, b, *, stride=1, apply_silu=False, temb=None):
    """3x3 conv, padding=1, NHWC, stride in {1, 2}.

    If `temb` (shape (B_t, Cout)) is given, the kernel additionally fuses
    PyTorch's `repeat_interleave(B_t // N, dim=0)` + broadcast temb add into the
    conv epilogue (grid over B_t, input index_map b -> b // factor).
    """
    N, H, W, Cin = x_nhwc.shape
    Cout = w_hwio.shape[-1]
    if stride == 2:
        assert H % 2 == 0 and W % 2 == 0, "stride-2 path assumes even H, W"
    Ho, Wo = (H, W) if stride == 1 else (H // 2, W // 2)

    xp = jnp.pad(x_nhwc, ((0, 0), (1, 1), (1, 1), (0, 0)))
    w9 = w_hwio.reshape(9 * Cin, Cout).astype(jnp.bfloat16)   # tap-major then cin
    b2 = b.reshape(1, Cout).astype(jnp.float32)

    add_temb = temb is not None
    if add_temb:
        B_out = temb.shape[0]
        assert B_out % N == 0
        factor = B_out // N
        t3 = temb.reshape(B_out, 1, Cout).astype(jnp.float32)
    else:
        B_out = N
        factor = 1

    in_specs = [
        pl.BlockSpec((1, H + 2, W + 2, Cin), lambda bb: (bb // factor, 0, 0, 0)),
        pl.BlockSpec((9 * Cin, Cout), lambda bb: (0, 0)),   # constant index: fetched once
        pl.BlockSpec((1, Cout), lambda bb: (0, 0)),
    ]
    args = [xp, w9, b2]
    if add_temb:
        in_specs.append(pl.BlockSpec((1, 1, Cout), lambda bb: (bb, 0, 0)))
        args.append(t3)

    kern = functools.partial(
        _conv3x3_kernel, Ho=Ho, Wo=Wo, Cin=Cin, stride=stride,
        apply_silu=apply_silu, add_temb=add_temb)

    out = pl.pallas_call(
        kern,
        out_shape=jax.ShapeDtypeStruct((B_out, Ho * Wo, Cout), x_nhwc.dtype),
        grid=(B_out,),
        in_specs=in_specs,
        out_specs=pl.BlockSpec((1, Ho * Wo, Cout), lambda bb: (bb, 0, 0)),
        compiler_params=pltpu.CompilerParams(dimension_semantics=("parallel",)),
    )(*args)
    return out.reshape(B_out, Ho, Wo, Cout)


def mv_controlnet_cond_embedding_forward(params, conditioning_nchw, temb=None):
    """Mirrors MultiViewControlNetConditioningEmbedding_V2.forward.

    conditioning_nchw: (N, C_cond, H, W) float32 (PyTorch layout)
    temb:              (B_t, temb_channels) or None
    returns (embedding_nchw, temb_residual)
    """
    x = jnp.transpose(conditioning_nchw, (0, 2, 3, 1))  # NCHW -> NHWC

    # temb = time_emb_proj(silu(temb)) -- computed up front so it can be fused
    # into the epilogue of the conv that precedes the broadcast add.
    tproj = None
    if temb is not None:
        c_last = params["time_emb_proj_w"].shape[1]
        vmem = pl.BlockSpec(memory_space=pltpu.MemorySpace.VMEM)
        tproj = pl.pallas_call(
            _silu_linear_kernel,
            out_shape=jax.ShapeDtypeStruct((temb.shape[0], c_last), jnp.float32),
            in_specs=[vmem, vmem, vmem],
            out_specs=vmem,
        )(temb, params["time_emb_proj_w"], params["time_emb_proj_b"].reshape(1, -1))

    blocks = params["blocks"]
    fuse_in_conv_in = tproj is not None and len(blocks) == 0
    x = conv2d_3x3(x, params["conv_in_w"], params["conv_in_b"], stride=1,
                   apply_silu=True, temb=tproj if fuse_in_conv_in else None)
    for idx, (w, b, s) in enumerate(blocks):
        fuse = tproj is not None and idx == len(blocks) - 1
        x = conv2d_3x3(x, w, b, stride=s, apply_silu=True,
                       temb=tproj if fuse else None)

    # x now holds `embedding + temb[:, :, None, None]` when temb is given
    # (repeat_interleave handled by the fused conv's index_map).
    temb_residual = None
    if temb is not None:
        Nb, Ho, Wo, C = x.shape
        T = params["tr_w2"].shape[0]
        vmem = pl.BlockSpec(memory_space=pltpu.MemorySpace.VMEM)
        temb_residual = pl.pallas_call(
            functools.partial(_temb_residual_kernel, n=Nb, hw=Ho * Wo),
            out_shape=jax.ShapeDtypeStruct((Nb, T), jnp.float32),
            in_specs=[vmem] * 5,
            out_specs=vmem,
        )(x.reshape(Nb * Ho * Wo, C),
          params["tr_w1"], params["tr_b1"].reshape(1, -1),
          params["tr_w2"], params["tr_b2"].reshape(1, -1))

    # conv_out (no activation)
    x = conv2d_3x3(x, params["conv_out_w"], params["conv_out_b"],
                   stride=1, apply_silu=False)
    embedding_nchw = jnp.transpose(x, (0, 3, 1, 2))  # back to PyTorch NCHW
    return embedding_nchw, temb_residual


# ----------------------------------------------------------------------------
# Deterministic parameter construction (shapes from the module's __init__)
# ----------------------------------------------------------------------------
def init_params(key,
                conditioning_embedding_channels,
                conditioning_channels,
                block_out_channels,
                temb_channels):
    def conv_w(k, cin, cout):  # HWIO
        return 0.05 * jax.random.normal(k, (3, 3, cin, cout), jnp.float32)

    keys = iter(jax.random.split(key, 64))
    params = {}
    params["conv_in_w"] = conv_w(next(keys), conditioning_channels, block_out_channels[0])
    params["conv_in_b"] = 0.05 * jax.random.normal(next(keys), (block_out_channels[0],), jnp.float32)

    blocks = []
    for i in range(len(block_out_channels) - 1):
        cin = block_out_channels[i]
        cout = block_out_channels[i + 1]
        blocks.append((conv_w(next(keys), cin, cin),
                       0.05 * jax.random.normal(next(keys), (cin,), jnp.float32), 1))
        blocks.append((conv_w(next(keys), cin, cout),
                       0.05 * jax.random.normal(next(keys), (cout,), jnp.float32), 2))
    params["blocks"] = blocks

    c_last = block_out_channels[-1]
    # TODO(synk): PyTorch zero_module() zero-inits the params below; small random
    # values are used here so the kernels compute non-trivial outputs.
    params["conv_out_w"] = conv_w(next(keys), c_last, conditioning_embedding_channels)
    params["conv_out_b"] = 0.05 * jax.random.normal(next(keys), (conditioning_embedding_channels,), jnp.float32)
    params["time_emb_proj_w"] = 0.05 * jax.random.normal(next(keys), (temb_channels, c_last), jnp.float32)
    params["time_emb_proj_b"] = 0.05 * jax.random.normal(next(keys), (c_last,), jnp.float32)
    params["tr_w1"] = 0.05 * jax.random.normal(next(keys), (c_last, temb_channels), jnp.float32)
    params["tr_b1"] = 0.05 * jax.random.normal(next(keys), (temb_channels,), jnp.float32)
    params["tr_w2"] = 0.05 * jax.random.normal(next(keys), (temb_channels, temb_channels), jnp.float32)
    params["tr_b2"] = 0.05 * jax.random.normal(next(keys), (temb_channels,), jnp.float32)
    return params


if __name__ == "__main__":
    key = jax.random.PRNGKey(0)
    k_param, k_cond, k_temb = jax.random.split(key, 3)

    # Small, module-consistent config
    conditioning_embedding_channels = 32
    conditioning_channels = 3
    block_out_channels = (16, 32, 64, 128)
    temb_channels = 256

    params = init_params(k_param,
                         conditioning_embedding_channels,
                         conditioning_channels,
                         block_out_channels,
                         temb_channels)

    # conditioning: NCHW (PyTorch convention); temb batch = 2x conditioning batch
    # to exercise the repeat_interleave path.
    conditioning = jax.random.normal(k_cond, (2, conditioning_channels, 16, 16), jnp.float32)
    temb = jax.random.normal(k_temb, (4, temb_channels), jnp.float32)

    embedding, temb_residual = mv_controlnet_cond_embedding_forward(params, conditioning, temb)
    jax.block_until_ready(embedding)
    jax.block_until_ready(temb_residual)

    assert embedding.shape == (4, conditioning_embedding_channels, 2, 2)
    assert temb_residual.shape == (4, temb_channels)
    print("KERNEL_OK")
</pallas_src>

<mosaic_0001>
module attributes {stable_mosaic.version = 11 : i64} {
  func.func @_silu_linear_kernel(%arg0: memref<4x256xf32, #tpu.memory_space<vmem>>, %arg1: memref<256x128xf32, #tpu.memory_space<vmem>>, %arg2: memref<1x128xf32, #tpu.memory_space<vmem>>, %arg3: memref<4x128xf32, #tpu.memory_space<vmem>>) attributes {dimension_semantics = [], scalar_prefetch = 0 : i64, scratch_operands = 0 : i64, tpu.core_type = #tpu.core_type<tc>} {
    %c0 = arith.constant 0 : index
    %c0_0 = arith.constant 0 : index
    %0 = vector.load %arg0[%c0, %c0_0] : memref<4x256xf32, #tpu.memory_space<vmem>>, vector<4x256xf32>
    %cst = arith.constant 0.000000e+00 : f32
    %1 = vector.broadcast %cst : f32 to vector<4x256xf32>
    %2 = arith.subf %1, %0 : vector<4x256xf32>
    %3 = math.exp %2 : vector<4x256xf32>
    %cst_1 = arith.constant 1.000000e+00 : f32
    %4 = vector.broadcast %cst_1 : f32 to vector<4x256xf32>
    %5 = arith.addf %4, %3 : vector<4x256xf32>
    %6 = tpu.reciprocal %5 {approx = true} : vector<4x256xf32> -> vector<4x256xf32>
    %7 = arith.mulf %0, %6 : vector<4x256xf32>
    %c0_2 = arith.constant 0 : index
    %c0_3 = arith.constant 0 : index
    %8 = vector.load %arg1[%c0_2, %c0_3] : memref<256x128xf32, #tpu.memory_space<vmem>>, vector<256x128xf32>
    %cst_4 = arith.constant dense<0.000000e+00> : vector<4x128xf32>
    %9 = tpu.matmul %7, %8, %cst_4 {dimension_numbers = #tpu.dot_dimension_numbers<[1], [0], [0], [1], [0, 0, 1, 1], [], []>} : vector<4x256xf32>, vector<256x128xf32>, vector<4x128xf32> -> vector<4x128xf32>
    %c0_5 = arith.constant 0 : index
    %c0_6 = arith.constant 0 : index
    %10 = vector.load %arg2[%c0_5, %c0_6] : memref<1x128xf32, #tpu.memory_space<vmem>>, vector<1x128xf32>
    %11 = vector.broadcast %10 : vector<1x128xf32> to vector<4x128xf32>
    %12 = arith.addf %9, %11 : vector<4x128xf32>
    %c0_7 = arith.constant 0 : index
    %c0_8 = arith.constant 0 : index
    %13 = vector.load %arg3[%c0_7, %c0_8] : memref<4x128xf32, #tpu.memory_space<vmem>>, vector<4x128xf32>
    tpu.vector_store %arg3[%c0_7, %c0_8], %12 {strides = array<i32>} : memref<4x128xf32, #tpu.memory_space<vmem>>, vector<4x128xf32>,
    return
  }
}

</mosaic_0001>

<llo_original>
// kernel: tpu_custom_call.1
$region0: #{tpu_custom_call.1}
  #allocation0 [shape = 'u32[]', space=smem, size = 0x4, offset = 0x4, fixed_abs, tag = 'smem constant byte address 0x4 - core index']
  #allocation1 [shape = 'u32[144,128]{1,0:T(1,128)}', space=vmem, size = 0x12000, scoped, tag = 'internal scratch']
  %s0 = inlined_call_operand.hbm [shape: f32[4,256], index: 0, kind: input, shape index: {}]
  %s1 = inlined_call_operand.hbm [shape: f32[256,128], index: 1, kind: input, shape index: {}]
  %s2 = inlined_call_operand.vmem [shape: f32[1,128], index: 2, kind: input, shape index: {}]
  %s3 = inlined_call_operand.hbm [shape: f32[4,128], index: 3, kind: output, shape index: {}]
  %s4 = sld [smem:[#allocation0]]
  $region30: #{tpu_custom_call.1} parent=0
    _
  %s6 = ssub.s32 1, %s4
  %s7 = scalar_select 0, %s6, %s4
  $region1: #{tpu_custom_call.1} parent=0
    #allocation2 [shape = 'u8[4096]{0}', space=vmem, size = 0x1000, scoped, tag = 'input window, operand 0, single buffered']
    #allocation3 [shape = 's32[1]{0}', space=sflag, size = 0x4, scoped, tag = 'scoped memory for tpu_custom_call.1']
    #allocation4 [shape = 's32[1]{0}', space=sflag, size = 0x4, scoped, tag = 'scoped memory for tpu_custom_call.1']
    #allocation5 [shape = 'u8[131072]{0}', space=vmem, size = 0x20000, scoped, tag = 'input window, operand 1, single buffered']
    #allocation6 [shape = 's32[1]{0}', space=sflag, size = 0x4, scoped, tag = 'scoped memory for tpu_custom_call.1']
    #allocation7 [shape = 'u8[2048]{0}', space=vmem, size = 0x800, scoped, tag = 'output window, operand 0, single buffered']
    %8 = vsyncpa [#allocation3], 0
    %9 = vsyncpa [#allocation6], 0
    %10 = vsyncpa [#allocation4], 0
    // Predicated region
    $region2: #{tpu_custom_call.1} parent=1 // pred_check
      _
    $region3: #{tpu_custom_call.1} parent=1 // pred_check_branch
      %12 = sbr.rel (0) target = $region5
    $region4: #{tpu_custom_call.1} parent=1 // pred_region
      %s14 = ssub.s32 128, 128
      %15 = vsyncadd [#allocation3], %s14
      %s17 = sshll.u32 [#allocation2], 4
      %s18 = int_to_ptr.vmem [resolvable:$true] %s17
      %20 = dma.hbm_to_vmem [thread:$0]  %s0, 128, %s18, [#allocation3]
    $region5: #{tpu_custom_call.1} parent=1 // pred_fallthru
      _
    // Predicated region
    $region6: #{tpu_custom_call.1} parent=1 // pred_check
      _
    $region7: #{tpu_custom_call.1} parent=1 // pred_check_branch
      %22 = sbr.rel (0) target = $region9
    $region8: #{tpu_custom_call.1} parent=1 // pred_region
      %s24 = ssub.s32 4096, 4096
      %25 = vsyncadd [#allocation6], %s24
      %s26 = sshll.u32 [#allocation5], 4
      %s27 = int_to_ptr.vmem [resolvable:$true] %s26
      %32 = dma.hbm_to_vmem [thread:$0]  %s1, 4096, %s27, [#allocation6], 128, 128, 8
    $region9: #{tpu_custom_call.1} parent=1 // pred_fallthru
      _
    // Predicated region
    $region10: #{tpu_custom_call.1} parent=1 // pred_check
      _
    $region11: #{tpu_custom_call.1} parent=1 // pred_check_branch
      %34 = sbr.rel (0) target = $region13
    $region12: #{tpu_custom_call.1} parent=1 // pred_region
      _
    $region13: #{tpu_custom_call.1} parent=1 // pred_fallthru
      _
    // Predicated region
    $region14: #{tpu_custom_call.1} parent=1 // pred_check
      _
    $region15: #{tpu_custom_call.1} parent=1 // pred_check_branch
      %36 = sbr.rel (0) target = $region17
    $region16: #{tpu_custom_call.1} parent=1 // pred_region
      %37 = dma.done [#allocation3], 128
    $region17: #{tpu_custom_call.1} parent=1 // pred_fallthru
      _
    // Predicated region
    $region18: #{tpu_custom_call.1} parent=1 // pred_check
      _
    $region19: #{tpu_custom_call.1} parent=1 // pred_check_branch
      %39 = sbr.rel (0) target = $region21
    $region20: #{tpu_custom_call.1} parent=1 // pred_region
      %40 = dma.done [#allocation6], 4096
    $region21: #{tpu_custom_call.1} parent=1 // pred_fallthru
      _
    %v41 = vld [vmem:[#allocation2] sm:$0xff]
    %v42 = vsub.f32 0.0, %v41
    %v43 = vmul.f32 %v42, 1.442695
    %v44 = vpow.pop %v43
    %v45 = vadd.f32 %v44, 1.0
    %v46 = vrcp.pop %v45
    %v47 = vmul.f32 %v41, %v46
    %v48 = vld [vmem:[#allocation5] sm:$0xff]
    %v49 = vld [vmem:[#allocation5 + $0x8] sm:$0xff]
    %v50 = vld [vmem:[#allocation5 + $0x10] sm:$0xff]
    %v51 = vld [vmem:[#allocation5 + $0x18] sm:$0xff]
    %v52 = vld [vmem:[#allocation5 + $0x20] sm:$0xff]
    %v53 = vld [vmem:[#allocation5 + $0x28] sm:$0xff]
    %v54 = vld [vmem:[#allocation5 + $0x30] sm:$0xff]
    %v55 = vld [vmem:[#allocation5 + $0x38] sm:$0xff]
    %v56 = vld [vmem:[#allocation5 + $0x40] sm:$0xff]
    %v57 = vld [vmem:[#allocation5 + $0x48] sm:$0xff]
    %v58 = vld [vmem:[#allocation5 + $0x50] sm:$0xff]
    %v59 = vld [vmem:[#allocation5 + $0x58] sm:$0xff]
    %v60 = vld [vmem:[#allocation5 + $0x60] sm:$0xff]
    %v61 = vld [vmem:[#allocation5 + $0x68] sm:$0xff]
    %v62 = vld [vmem:[#allocation5 + $0x70] sm:$0xff]
    %v63 = vld [vmem:[#allocation5 + $0x78] sm:$0xff]
    %v64 = vld [vmem:[#allocation5 + $0x80] sm:$0xff]
    %v65 = vld [vmem:[#allocation5 + $0x88] sm:$0xff]
    %v66 = vld [vmem:[#allocation5 + $0x90] sm:$0xff]
    %v67 = vld [vmem:[#allocation5 + $0x98] sm:$0xff]
    %v68 = vld [vmem:[#allocation5 + $0xa0] sm:$0xff]
    %v69 = vld [vmem:[#allocation5 + $0xa8] sm:$0xff]
    %v70 = vld [vmem:[#allocation5 + $0xb0] sm:$0xff]
    %v71 = vld [vmem:[#allocation5 + $0xb8] sm:$0xff]
    %v72 = vld [vmem:[#allocation5 + $0xc0] sm:$0xff]
    %v73 = vld [vmem:[#allocation5 + $0xc8] sm:$0xff]
    %v74 = vld [vmem:[#allocation5 + $0xd0] sm:$0xff]
    %v75 = vld [vmem:[#allocation5 + $0xd8] sm:$0xff]
    %v76 = vld [vmem:[#allocation5 + $0xe0] sm:$0xff]
    %v77 = vld [vmem:[#allocation5 + $0xe8] sm:$0xff]
    %v78 = vld [vmem:[#allocation5 + $0xf0] sm:$0xff]
    %v79 = vld [vmem:[#allocation5 + $0xf8] sm:$0xff]
    %v80 = vld [vmem:[%s2] sm:$0x1]
    %v82 = vlaneseq
    %v83 = vshrl.u32 %v82, 7
    %v84 = vsub.s32 0, %v83
    %v85 = vrot.slane %v80, %v84
    %v88 = vcombine.high %v47, %v47
    %90 = vmatprep.subr.mxu0 0.0
    %91 = vmatpush1.msra.mxu0 %v48
    %92 = vmatprep.subr.mxu0 0.0
    %93 = vmatpush1.msra.mxu0 %v49
    %94 = vmatprep.subr.mxu0 0.0
    %95 = vmatpush1.msra.mxu0 %v50
    %96 = vmatprep.subr.mxu0 0.0
    %97 = vmatpush1.msra.mxu0 %v51
    %98 = vmatprep.subr.mxu0 0.0
    %99 = vmatpush1.msra.mxu0 %v52
    %100 = vmatprep.subr.mxu0 0.0
    %101 = vmatpush1.msra.mxu0 %v53
    %102 = vmatprep.subr.mxu0 0.0
    %103 = vmatpush1.msra.mxu0 %v54
    %104 = vmatprep.subr.mxu0 0.0
    %105 = vmatpush1.msra.mxu0 %v55
    %106 = vmatprep.subr.mxu0 0.0
    %107 = vmatpush1.msra.mxu0 %v56
    %108 = vmatprep.subr.mxu0 0.0
    %109 = vmatpush1.msra.mxu0 %v57
    %110 = vmatprep.subr.mxu0 0.0
    %111 = vmatpush1.msra.mxu0 %v58
    %112 = vmatprep.subr.mxu0 0.0
    %113 = vmatpush1.msra.mxu0 %v59
    %114 = vmatprep.subr.mxu0 0.0
    %115 = vmatpush1.msra.mxu0 %v60
    %116 = vmatprep.subr.mxu0 0.0
    %117 = vmatpush1.msra.mxu0 %v61
    %118 = vmatprep.subr.mxu0 0.0
    %119 = vmatpush1.msra.mxu0 %v62
    %120 = vmatprep.subr.mxu0 0.0
    %121 = vmatpush1.msra.mxu0 %v63
    %122 = vmatprep.subr.mxu0 0.0
    %123 = vmatpush1.msra.mxu0 %v64
    %124 = vmatprep.subr.mxu0 0.0
    %125 = vmatpush1.msra.mxu0 %v65
    %126 = vmatprep.subr.mxu0 0.0
    %127 = vmatpush1.msra.mxu0 %v66
    %128 = vmatprep.subr.mxu0 0.0
    %129 = vmatpush1.msra.mxu0 %v67
    %130 = vmatprep.subr.mxu0 0.0
    %131 = vmatpush1.msra.mxu0 %v68
    %132 = vmatprep.subr.mxu0 0.0
    %133 = vmatpush1.msra.mxu0 %v69
    %134 = vmatprep.subr.mxu0 0.0
    %135 = vmatpush1.msra.mxu0 %v70
    %136 = vmatprep.subr.mxu0 0.0
    %137 = vmatpush1.msra.mxu0 %v71
    %138 = vmatprep.subr.mxu0 0.0
    %139 = vmatpush1.msra.mxu0 %v72
    %140 = vmatprep.subr.mxu0 0.0
    %141 = vmatpush1.msra.mxu0 %v73
    %142 = vmatprep.subr.mxu0 0.0
    %143 = vmatpush1.msra.mxu0 %v74
    %144 = vmatprep.subr.mxu0 0.0
    %145 = vmatpush1.msra.mxu0 %v75
    %146 = vmatprep.subr.mxu0 0.0
    %147 = vmatpush1.msra.mxu0 %v76
    %148 = vmatprep.subr.mxu0 0.0
    %149 = vmatpush1.msra.mxu0 %v77
    %150 = vmatprep.subr.mxu0 0.0
    %151 = vmatpush1.msra.mxu0 %v78
    %152 = vmatprep.subr.mxu0 0.0
    %153 = vmatpush1.msra.mxu0 %v79
    %154 = vmatprep.mubr.f32.mxu0 %v88
    %155 = vmatmul.mubr.f32.gmra.mrb[0].mxu0 %v47
    %v156 = vpop.f32.mrb[0].mxu0
    %v157 = vadd.f32 %v85, %v156
    %v158 = vpop.f32.mrb[0].mxu0
    %159 = vdwg.mxu0
    %160 = vst [vmem:[#allocation7] sm:$0xf] %v157
    // Predicated region
    $region22: #{tpu_custom_call.1} parent=1 // pred_check
      _
    $region23: #{tpu_custom_call.1} parent=1 // pred_check_branch
      %162 = sbr.rel (0) target = $region25
    $region24: #{tpu_custom_call.1} parent=1 // pred_region
      %s164 = ssub.s32 64, 64
      %165 = vsyncadd [#allocation4], %s164
      %s167 = sshll.u32 [#allocation7], 4
      %s168 = int_to_ptr.vmem [resolvable:$true] %s167
      %170 = dma.vmem_to_hbm [thread:$0]  %s168, 64, %s3, [#allocation4]
    $region25: #{tpu_custom_call.1} parent=1 // pred_fallthru
      _
    // Predicated region
    $region26: #{tpu_custom_call.1} parent=1 // pred_check
      _
    $region27: #{tpu_custom_call.1} parent=1 // pred_check_branch
      %172 = sbr.rel (0) target = $region29
    $region28: #{tpu_custom_call.1} parent=1 // pred_region
      %173 = dma.done [#allocation4], 64
    $region29: #{tpu_custom_call.1} parent=1 // pred_fallthru
      _
    %174 = vsyncpa [#allocation3], 1
    %175 = vsyncpa [#allocation6], 1
    %176 = vsyncpa [#allocation4], 1

</llo_original>
